<compile_context>
chip_gen: v7x
topology: tpu7x:2x2x1
jax: 0.10.0
libtpu: 0.0.40
codegen_flags: <defaults>
</compile_context>

<pallas_src>
import jax
import jax.numpy as jnp
from jax.experimental import pallas as pl
from jax.experimental.pallas import tpu as pltpu

# ----------------------------- model config (scaled down) -----------------------------
IMG_SIZE = 16          # stands in for 448
PATCH = 4              # stands in for 14
VISION_HIDDEN = 32     # stands in for 1024
VISION_HEADS = 4
VISION_LAYERS = 2
DOWNSAMPLE = 0.5       # InternVL pixel_shuffle scale factor
LLM_HIDDEN = 32        # stands in for 896 (Qwen2-0.5B)
LLM_HEADS = 4
LLM_LAYERS = 1
VOCAB = 64
MAX_NEW_TOKENS = 3     # stands in for 1024

GRID = IMG_SIZE // PATCH                              # 4x4 patches per tile
IMG_TOKENS_PER_TILE = int((GRID * DOWNSAMPLE) ** 2)   # 4 (stands in for 256)

# synthetic tokenizer ids
BOS_ID, IMG_START_ID, IMG_END_ID, IMG_CONTEXT_ID = 1, 2, 3, 4
PROMPT_IDS = (5, 6)    # stands in for "<latex>" prompt tokens

IMAGENET_MEAN = jnp.array([0.485, 0.456, 0.406], jnp.float32)
IMAGENET_STD = jnp.array([0.229, 0.224, 0.225], jnp.float32)

VMEM_LIMIT = 32 * 1024 * 1024   # safe raise on v5e, <= default headroom on v6e/v7x

LLM_WEIGHT_NAMES = ['rms1_g', 'qkv_w', 'qkv_b', 'o_w', 'o_b', 'rms2_g', 'gu_w', 'down_w']
VIT_WEIGHT_NAMES = ['ln1_g', 'ln1_b', 'qkv_w', 'qkv_b', 'proj_w', 'proj_b', 'ls1',
                    'ln2_g', 'ln2_b', 'fc1_w', 'fc1_b', 'fc2_w', 'fc2_b', 'ls2']


# ----------------------------- small helpers -----------------------------
def _w_spec(shape):
    """Full-array block broadcast to every grid step (1-D grid)."""
    zeros = (0,) * len(shape)
    return pl.BlockSpec(shape, lambda n, _z=zeros: _z)


def _ln(x_f32, g, b, eps=1e-6):
    mu = jnp.mean(x_f32, axis=-1, keepdims=True)
    var = jnp.mean(jnp.square(x_f32 - mu), axis=-1, keepdims=True)
    return ((x_f32 - mu) * jax.lax.rsqrt(var + eps) * g.astype(jnp.float32)
            + b.astype(jnp.float32))


def _rms(x_f32, g, eps=1e-6):
    ms = jnp.mean(x_f32 * x_f32, axis=-1, keepdims=True)
    return x_f32 * jax.lax.rsqrt(ms + eps) * g.astype(jnp.float32)


def _split_heads(x2d, heads, dh):
    # [S, H*Dh] -> [H, S, Dh] via static lane slices + leading-axis stack.
    # (At real scale with Dh=64 a pure reshape/einshape avoids the slice relayouts.)
    return jnp.stack([x2d[:, h * dh:(h + 1) * dh] for h in range(heads)], axis=0)


def _merge_heads(x3d):
    # [H, S, Dh] -> [S, H*Dh]
    return jnp.concatenate([x3d[h] for h in range(x3d.shape[0])], axis=-1)


def _batched_attention(q3, k3, v3, mask=None):
    """One batched QK^T + softmax + PV over a leading head axis.

    q3/k3/v3: [H, Sq, Dh] / [H, Sk, Dh] / [H, Sk, Dh] (bf16), scale already folded into q3.
    mask: optional bool [1, Sq, Sk] (True = keep).  Returns f32 [H, Sq, Dh].
    """
    s = jax.lax.dot_general(q3, k3, (((2,), (2,)), ((0,), (0,))),
                            preferred_element_type=jnp.float32)      # [H, Sq, Sk]
    if mask is not None:
        s = jnp.where(mask, s, -1e30)
    s = s - jnp.max(s, axis=-1, keepdims=True)
    p = jnp.exp(s)
    p = p * pl.reciprocal(jnp.sum(p, axis=-1, keepdims=True), approx=True)
    return jax.lax.dot_general(p.astype(jnp.bfloat16), v3, (((2,), (1,)), ((0,), (0,))),
                               preferred_element_type=jnp.float32)   # [H, Sq, Dh]


# ----------------------------- Pallas kernels -----------------------------
def _patch_embed_kernel(x_ref, w_ref, b_ref, o_ref):
    # ImageNet normalization is pre-folded into w/b at init: pure MXU matmul.
    acc = jnp.dot(x_ref[...].astype(jnp.bfloat16), w_ref[...],
                  preferred_element_type=jnp.float32)
    o_ref[...] = (acc + b_ref[...]).astype(o_ref.dtype)


def _vision_block_kernel(x_ref, ln1_g, ln1_b, qkv_w, qkv_b, proj_w, proj_b, ls1,
                         ln2_g, ln2_b, fc1_w, fc1_b, fc2_w, fc2_b, ls2, o_ref):
    C = x_ref.shape[2]
    H = VISION_HEADS
    Dh = C // H
    x = x_ref[0].astype(jnp.float32)                      # [S, C] f32 residual stream

    # ---- LN1 + fused QKV projection (bf16 into MXU) + batched attention ----
    h = _ln(x, ln1_g[...], ln1_b[...]).astype(jnp.bfloat16)
    qkv = (jnp.dot(h, qkv_w[...], preferred_element_type=jnp.float32)
           + qkv_b[...].astype(jnp.float32))              # [S, 3C] f32
    q = qkv[:, :C] * (Dh ** -0.5)                         # softmax scale folded into q
    q3 = _split_heads(q.astype(jnp.bfloat16), H, Dh)
    k3 = _split_heads(qkv[:, C:2 * C].astype(jnp.bfloat16), H, Dh)
    v3 = _split_heads(qkv[:, 2 * C:].astype(jnp.bfloat16), H, Dh)
    ctx = _batched_attention(q3, k3, v3)                  # [H, S, Dh] f32
    attn = _merge_heads(ctx).astype(jnp.bfloat16)         # [S, C]
    proj = (jnp.dot(attn, proj_w[...], preferred_element_type=jnp.float32)
            + proj_b[...].astype(jnp.float32))
    x = x + ls1[...] * proj                               # layer scale kept in f32

    # ---- LN2 + GELU MLP ----
    # TODO(synk): jax.nn.gelu defaults to the tanh approximation; real InternViT uses exact erf GELU.
    h2 = _ln(x, ln2_g[...], ln2_b[...]).astype(jnp.bfloat16)
    m = (jnp.dot(h2, fc1_w[...], preferred_element_type=jnp.float32)
         + fc1_b[...].astype(jnp.float32))
    m = jax.nn.gelu(m).astype(jnp.bfloat16)
    m = (jnp.dot(m, fc2_w[...], preferred_element_type=jnp.float32)
         + fc2_b[...].astype(jnp.float32))
    x = x + ls2[...] * m
    o_ref[0] = x.astype(o_ref.dtype)


def _mlp1_kernel(x_ref, ln_g, ln_b, w1, b1, w2, b2, o_ref):
    # mlp1 projector: LN(4C) -> Linear -> GELU -> Linear, fused; gridded over image tiles.
    x = x_ref[0].astype(jnp.float32)
    h = _ln(x, ln_g[...], ln_b[...]).astype(jnp.bfloat16)
    h = (jnp.dot(h, w1[...], preferred_element_type=jnp.float32)
         + b1[...].astype(jnp.float32))
    h = jax.nn.gelu(h).astype(jnp.bfloat16)
    h = (jnp.dot(h, w2[...], preferred_element_type=jnp.float32)
         + b2[...].astype(jnp.float32))
    o_ref[0] = h.astype(o_ref.dtype)


def _llm_prefill_kernel(x_ref, rms1_g, qkv_w, qkv_b, o_w, o_b, rms2_g, gu_w, down_w,
                        y_ref, kc_ref, vc_ref):
    # Fused Qwen2-style decoder block over the full prompt (causal) + KV-cache emit.
    # TODO(synk): RoPE of the real Qwen2 decoder is omitted.
    S, D = x_ref.shape[1], x_ref.shape[2]
    H = LLM_HEADS
    Dh = D // H
    x = x_ref[0].astype(jnp.float32)                      # [S, D]

    h = _rms(x, rms1_g[...]).astype(jnp.bfloat16)
    qkv = (jnp.dot(h, qkv_w[...], preferred_element_type=jnp.float32)
           + qkv_b[...].astype(jnp.float32))              # [S, 3D]
    q = qkv[:, :D] * (Dh ** -0.5)
    k = qkv[:, D:2 * D]
    v = qkv[:, 2 * D:]
    kc_ref[0] = k.astype(kc_ref.dtype)
    vc_ref[0] = v.astype(vc_ref.dtype)

    q3 = _split_heads(q.astype(jnp.bfloat16), H, Dh)
    k3 = _split_heads(k.astype(jnp.bfloat16), H, Dh)
    v3 = _split_heads(v.astype(jnp.bfloat16), H, Dh)
    qi = jax.lax.broadcasted_iota(jnp.int32, (S, S), 0)
    ki = jax.lax.broadcasted_iota(jnp.int32, (S, S), 1)
    causal = (ki <= qi)[None]                             # [1, S, S]
    ctx = _batched_attention(q3, k3, v3, mask=causal)     # [H, S, Dh]
    attn = _merge_heads(ctx).astype(jnp.bfloat16)
    o = (jnp.dot(attn, o_w[...], preferred_element_type=jnp.float32)
         + o_b[...].astype(jnp.float32))
    x = x + o

    h2 = _rms(x, rms2_g[...]).astype(jnp.bfloat16)
    gu = jnp.dot(h2, gu_w[...], preferred_element_type=jnp.float32)   # fused gate|up
    inter = gu.shape[1] // 2
    mid = (jax.nn.silu(gu[:, :inter]) * gu[:, inter:]).astype(jnp.bfloat16)
    mlp = jnp.dot(mid, down_w[...], preferred_element_type=jnp.float32)
    x = x + mlp
    y_ref[0] = x.astype(y_ref.dtype)


def _llm_decode_kernel(pos_ref, x_ref, kc_ref, vc_ref, rms1_g, qkv_w, qkv_b, o_w, o_b,
                       rms2_g, gu_w, down_w, y_ref, kn_ref, vn_ref):
    # Single-token fused decoder step attending over the KV cache.
    # Mask built in-kernel from `pos` (SMEM scalar); no f32 mask row DMA.
    # TODO(synk): RoPE omitted, matching the prefill kernel.
    # TODO(synk): at real cache lengths bound the cache DMA/read by `pos` (chunk + pl.when).
    D = x_ref.shape[2]
    L = kc_ref.shape[1]
    H = LLM_HEADS
    Dh = D // H
    pos = pos_ref[0]
    x = x_ref[0].astype(jnp.float32)                      # [1, D]

    h = _rms(x, rms1_g[...]).astype(jnp.bfloat16)
    qkv = (jnp.dot(h, qkv_w[...], preferred_element_type=jnp.float32)
           + qkv_b[...].astype(jnp.float32))
    q = qkv[:, :D] * (Dh ** -0.5)
    k = qkv[:, D:2 * D]
    v = qkv[:, 2 * D:]
    kn_ref[0] = k.astype(kn_ref.dtype)
    vn_ref[0] = v.astype(vn_ref.dtype)

    q3 = _split_heads(q.astype(jnp.bfloat16), H, Dh)      # [H, 1, Dh]
    k3 = _split_heads(k.astype(jnp.bfloat16), H, Dh)
    v3 = _split_heads(v, H, Dh)                           # f32, used in self term
    kc3 = _split_heads(kc_ref[0], H, Dh)                  # [H, L, Dh] bf16 cache
    vc3 = _split_heads(vc_ref[0], H, Dh)

    s_cache = jax.lax.dot_general(q3, kc3, (((2,), (2,)), ((0,), (0,))),
                                  preferred_element_type=jnp.float32)   # [H, 1, L]
    valid = jax.lax.broadcasted_iota(jnp.int32, (1, 1, L), 2) < pos
    s_cache = jnp.where(valid, s_cache, -1e30)
    s_self = jnp.sum(q3.astype(jnp.float32) * k3.astype(jnp.float32),
                     axis=-1, keepdims=True)                            # [H, 1, 1]
    mx = jnp.maximum(jnp.max(s_cache, axis=-1, keepdims=True), s_self)
    p_cache = jnp.exp(s_cache - mx)
    p_self = jnp.exp(s_self - mx)
    denom = jnp.sum(p_cache, axis=-1, keepdims=True) + p_self
    ctx = jax.lax.dot_general(p_cache.astype(jnp.bfloat16), vc3,
                              (((2,), (1,)), ((0,), (0,))),
                              preferred_element_type=jnp.float32)       # [H, 1, Dh]
    ctx = ctx + p_self * v3
    attn = _merge_heads(ctx * pl.reciprocal(denom, approx=True)).astype(jnp.bfloat16)
    o = (jnp.dot(attn, o_w[...], preferred_element_type=jnp.float32)
         + o_b[...].astype(jnp.float32))
    x = x + o

    h2 = _rms(x, rms2_g[...]).astype(jnp.bfloat16)
    gu = jnp.dot(h2, gu_w[...], preferred_element_type=jnp.float32)
    inter = gu.shape[1] // 2
    mid = (jax.nn.silu(gu[:, :inter]) * gu[:, inter:]).astype(jnp.bfloat16)
    mlp = jnp.dot(mid, down_w[...], preferred_element_type=jnp.float32)
    x = x + mlp
    y_ref[0] = x.astype(y_ref.dtype)


def _lm_head_kernel(x_ref, g_ref, w_ref, b_ref, o_ref):
    # Final RMSNorm + LM head, last token(s) only.
    # TODO(synk): at real vocab (~151k) tile the vocab axis / running argmax instead.
    x = x_ref[...].astype(jnp.float32)
    h = _rms(x, g_ref[...]).astype(jnp.bfloat16)
    logits = jnp.dot(h, w_ref[...], preferred_element_type=jnp.float32) + b_ref[...]
    o_ref[...] = logits


# ----------------------------- Pallas wrappers -----------------------------
def patch_embed(patches, w, b, rows_per_tile):
    R, K = patches.shape
    C = w.shape[1]
    n_tiles = R // rows_per_tile
    return pl.pallas_call(
        _patch_embed_kernel,
        out_shape=jax.ShapeDtypeStruct((R, C), jnp.bfloat16),
        grid=(n_tiles,),
        in_specs=[pl.BlockSpec((rows_per_tile, K), lambda n: (n, 0)),
                  _w_spec(w.shape), _w_spec(b.shape)],
        out_specs=pl.BlockSpec((rows_per_tile, C), lambda n: (n, 0)),
        compiler_params=pltpu.CompilerParams(dimension_semantics=("parallel",)),
    )(patches, w, b)


def vision_block(x, p):
    Nt, S, C = x.shape
    weights = [p[n] for n in VIT_WEIGHT_NAMES]
    spec = pl.BlockSpec((1, S, C), lambda n: (n, 0, 0))
    return pl.pallas_call(
        _vision_block_kernel,
        out_shape=jax.ShapeDtypeStruct((Nt, S, C), x.dtype),
        grid=(Nt,),
        in_specs=[spec] + [_w_spec(w.shape) for w in weights],
        out_specs=spec,
        compiler_params=pltpu.CompilerParams(dimension_semantics=("parallel",),
                                             vmem_limit_bytes=VMEM_LIMIT),
    )(x, *weights)


def mlp1_project(x3, params):
    Nt, T, Dm = x3.shape
    weights = [params['mlp1_ln_g'], params['mlp1_ln_b'], params['mlp1_w1'],
               params['mlp1_b1'], params['mlp1_w2'], params['mlp1_b2']]
    spec_in = pl.BlockSpec((1, T, Dm), lambda n: (n, 0, 0))
    spec_out = pl.BlockSpec((1, T, LLM_HIDDEN), lambda n: (n, 0, 0))
    return pl.pallas_call(
        _mlp1_kernel,
        out_shape=jax.ShapeDtypeStruct((Nt, T, LLM_HIDDEN), jnp.bfloat16),
        grid=(Nt,),
        in_specs=[spec_in] + [_w_spec(w.shape) for w in weights],
        out_specs=spec_out,
        compiler_params=pltpu.CompilerParams(dimension_semantics=("parallel",)),
    )(x3, *weights)


def llm_prefill_block(x, p):
    B, S, D = x.shape
    weights = [p[n] for n in LLM_WEIGHT_NAMES]
    spec = pl.BlockSpec((1, S, D), lambda b: (b, 0, 0))
    out_shapes = (jax.ShapeDtypeStruct((B, S, D), x.dtype),
                  jax.ShapeDtypeStruct((B, S, D), jnp.bfloat16),
                  jax.ShapeDtypeStruct((B, S, D), jnp.bfloat16))
    return pl.pallas_call(
        _llm_prefill_kernel,
        out_shape=out_shapes,
        grid=(B,),
        in_specs=[spec] + [_w_spec(w.shape) for w in weights],
        out_specs=(spec, spec, spec),
        compiler_params=pltpu.CompilerParams(dimension_semantics=("parallel",),
                                             vmem_limit_bytes=VMEM_LIMIT),
    )(x, *weights)


def llm_decode_block(x_new, kcache_l, vcache_l, pos_arr, p):
    B, _, D = x_new.shape
    L = kcache_l.shape[1]
    weights = [p[n] for n in LLM_WEIGHT_NAMES]
    spec_pos = pl.BlockSpec(memory_space=pltpu.MemorySpace.SMEM)
    spec_x = pl.BlockSpec((1, 1, D), lambda b: (b, 0, 0))
    spec_c = pl.BlockSpec((1, L, D), lambda b: (b, 0, 0))
    out_shapes = (jax.ShapeDtypeStruct((B, 1, D), x_new.dtype),
                  jax.ShapeDtypeStruct((B, 1, D), jnp.bfloat16),
                  jax.ShapeDtypeStruct((B, 1, D), jnp.bfloat16))
    return pl.pallas_call(
        _llm_decode_kernel,
        out_shape=out_shapes,
        grid=(B,),
        in_specs=[spec_pos, spec_x, spec_c, spec_c]
                 + [_w_spec(w.shape) for w in weights],
        out_specs=(spec_x, spec_x, spec_x),
        compiler_params=pltpu.CompilerParams(dimension_semantics=("parallel",),
                                             vmem_limit_bytes=VMEM_LIMIT),
    )(pos_arr, x_new, kcache_l, vcache_l, *weights)


def lm_head(x_last, params):
    B, D = x_last.shape
    return pl.pallas_call(
        _lm_head_kernel,
        out_shape=jax.ShapeDtypeStruct((B, VOCAB), jnp.float32),
        grid=(1,),
        in_specs=[pl.BlockSpec((B, D), lambda i: (0, 0)),
                  _w_spec(params['final_rms_g'].shape),
                  _w_spec(params['lm_head_w'].shape),
                  _w_spec(params['lm_head_b'].shape)],
        out_specs=pl.BlockSpec((B, VOCAB), lambda i: (0, 0)),
    )(x_last, params['final_rms_g'], params['lm_head_w'], params['lm_head_b'])


# ----------------------------- parameter init (deterministic, synthetic) -----------------------------
def init_params(key):
    keys = iter(jax.random.split(key, 64))

    def nrm(shape, scale=0.02):
        return (scale * jax.random.normal(next(keys), shape, jnp.float32)).astype(jnp.bfloat16)

    def ones(shape):
        return jnp.ones(shape, jnp.bfloat16)

    def zeros(shape):
        return jnp.zeros(shape, jnp.bfloat16)

    C, D = VISION_HIDDEN, LLM_HIDDEN
    K = PATCH * PATCH * 3

    # ImageNet normalization folded into the patch-embed weights (per-column (py,px,c) layout).
    base_patch_w = 0.02 * jax.random.normal(next(keys), (K, C), jnp.float32)
    scale_vec = jnp.tile(1.0 / IMAGENET_STD, PATCH * PATCH)                  # [K]
    bias_vec = jnp.tile(-IMAGENET_MEAN / IMAGENET_STD, PATCH * PATCH)        # [K]

    params = {
        'patch_w': (scale_vec[:, None] * base_patch_w).astype(jnp.bfloat16),
        'patch_b': (bias_vec @ base_patch_w)[None, :].astype(jnp.float32),
        'cls_token': nrm((1, 1, C)),
        'pos_embed': nrm((1, GRID * GRID + 1, C)),
        'vit_layers': [],
        # mlp1 projector: LN(4C) -> Linear(4C, D) -> GELU -> Linear(D, D)
        'mlp1_ln_g': ones((1, 4 * C)), 'mlp1_ln_b': zeros((1, 4 * C)),
        'mlp1_w1': nrm((4 * C, D)), 'mlp1_b1': zeros((1, D)),
        'mlp1_w2': nrm((D, D)), 'mlp1_b2': zeros((1, D)),
        # LLM
        'embed': nrm((VOCAB, D)),
        'llm_layers': [],
        'final_rms_g': ones((1, D)),
        'lm_head_w': nrm((D, VOCAB)),
        'lm_head_b': jnp.zeros((1, VOCAB), jnp.float32),
    }
    for _ in range(VISION_LAYERS):
        params['vit_layers'].append({
            'ln1_g': ones((1, C)), 'ln1_b': zeros((1, C)),
            'qkv_w': nrm((C, 3 * C)), 'qkv_b': zeros((1, 3 * C)),
            'proj_w': nrm((C, C)), 'proj_b': zeros((1, C)),
            'ls1': 0.1 * jnp.ones((1, C), jnp.float32),          # layer scale in f32
            'ln2_g': ones((1, C)), 'ln2_b': zeros((1, C)),
            'fc1_w': nrm((C, 4 * C)), 'fc1_b': zeros((1, 4 * C)),
            'fc2_w': nrm((4 * C, C)), 'fc2_b': zeros((1, C)),
            'ls2': 0.1 * jnp.ones((1, C), jnp.float32),
        })
    for _ in range(LLM_LAYERS):
        params['llm_layers'].append({
            'rms1_g': ones((1, D)),
            'qkv_w': nrm((D, 3 * D)), 'qkv_b': zeros((1, 3 * D)),   # fused q|k|v
            'o_w': nrm((D, D)), 'o_b': zeros((1, D)),
            'rms2_g': ones((1, D)),
            'gu_w': nrm((D, 4 * D)),                                 # fused gate|up (I = 2D)
            'down_w': nrm((2 * D, D)),
        })
    return params


# ----------------------------- model glue (plain JAX around the kernels) -----------------------------
def pixel_shuffle(x, scale_factor=0.5):
    # InternVL pixel_shuffle, ps_version='v2' (pure layout, kept in XLA)
    n, w, h, c = x.shape
    x = x.reshape(n, w, int(h * scale_factor), int(c / scale_factor))
    x = jnp.transpose(x, (0, 2, 1, 3))
    x = x.reshape(n, int(h * scale_factor), int(w * scale_factor),
                  int(c / (scale_factor * scale_factor)))
    x = jnp.transpose(x, (0, 2, 1, 3))
    return x


def extract_vision_features(params, pixel_values_nchw):
    Nt = pixel_values_nchw.shape[0]
    C = VISION_HIDDEN
    # NCHW -> flattened (py, px, c) patches; normalization is folded into patch_w/patch_b.
    nhwc = jnp.transpose(pixel_values_nchw, (0, 2, 3, 1))
    patches = nhwc.reshape(Nt, GRID, PATCH, GRID, PATCH, 3)
    patches = jnp.transpose(patches, (0, 1, 3, 2, 4, 5)).reshape(
        Nt * GRID * GRID, PATCH * PATCH * 3)
    x = patch_embed(patches, params['patch_w'], params['patch_b'],
                    rows_per_tile=GRID * GRID)
    x = x.reshape(Nt, GRID * GRID, C)
    cls = jnp.broadcast_to(params['cls_token'], (Nt, 1, C)).astype(x.dtype)
    x = jnp.concatenate([cls, x], axis=1) + params['pos_embed']

    for p in params['vit_layers']:
        x = vision_block(x, p)

    vit = x[:, 1:, :].reshape(Nt, GRID, GRID, C)          # drop cls token
    vit = pixel_shuffle(vit, DOWNSAMPLE)
    vit = vit.reshape(Nt, -1, C * 4)                      # [Nt, 4, 128]
    h = mlp1_project(vit, params)                         # [Nt, 4, D]
    return h.reshape(Nt * vit.shape[1], LLM_HIDDEN)       # [Nt*T, D]


def internvl_forward(params, pixel_values_nchw, input_ids, max_new_tokens=MAX_NEW_TOKENS):
    vit_embeds = extract_vision_features(params, pixel_values_nchw)
    B, S0 = input_ids.shape
    D = LLM_HIDDEN
    n_layers = len(params['llm_layers'])
    L_max = S0 + max_new_tokens

    # embed prompt + splice image embeddings at <IMG_CONTEXT> positions
    emb = jnp.take(params['embed'], input_ids, axis=0)    # [B, S0, D]
    flat = emb.reshape(B * S0, D)
    sel = (input_ids.reshape(-1) == IMG_CONTEXT_ID)
    idx = jnp.nonzero(sel, size=vit_embeds.shape[0])[0]
    flat = flat.at[idx].set(vit_embeds.astype(flat.dtype))
    x = flat.reshape(B, S0, D)

    # ---- prefill: run all layers over the prompt, write into preallocated KV caches ----
    kcache = jnp.zeros((n_layers, B, L_max, D), jnp.bfloat16)
    vcache = jnp.zeros((n_layers, B, L_max, D), jnp.bfloat16)
    for li, p in enumerate(params['llm_layers']):
        x, k, v = llm_prefill_block(x, p)
        kcache = kcache.at[li, :, :S0, :].set(k)
        vcache = vcache.at[li, :, :S0, :].set(v)
    logits = lm_head(x[:, -1, :], params)                 # last position only
    next_tok = jnp.argmax(logits, axis=-1).astype(jnp.int32)

    ids = jnp.zeros((B, L_max), jnp.int32)
    ids = ids.at[:, :S0].set(input_ids.astype(jnp.int32))
    ids = ids.at[:, S0].set(next_tok)

    # ---- greedy decode with KV cache under lax.fori_loop (do_sample=False) ----
    def decode_step(t, carry):
        ids, next_tok, kcache, vcache = carry
        pos = (S0 + t - 1).astype(jnp.int32)              # position of the fed token
        pos_arr = pos.reshape(1)
        x_new = jnp.take(params['embed'], next_tok, axis=0)[:, None, :]
        for li, p in enumerate(params['llm_layers']):
            x_new, k_new, v_new = llm_decode_block(x_new, kcache[li], vcache[li], pos_arr, p)
            kcache = jax.lax.dynamic_update_slice(
                kcache, k_new[None], (jnp.int32(li), jnp.int32(0), pos, jnp.int32(0)))
            vcache = jax.lax.dynamic_update_slice(
                vcache, v_new[None], (jnp.int32(li), jnp.int32(0), pos, jnp.int32(0)))
        logits = lm_head(x_new[:, 0, :], params)
        next_tok = jnp.argmax(logits, axis=-1).astype(jnp.int32)
        ids = jax.lax.dynamic_update_slice(ids, next_tok[:, None], (jnp.int32(0), pos + 1))
        return ids, next_tok, kcache, vcache

    ids, _, _, _ = jax.lax.fori_loop(1, max_new_tokens, decode_step,
                                     (ids, next_tok, kcache, vcache))
    return ids


# ----------------------------- main -----------------------------
if __name__ == "__main__":
    root = jax.random.PRNGKey(0)
    params = init_params(root)

    # batch of 2 images; dynamic_preprocess yields 2 tiles each -> 4 tiles total,
    # NCHW like the PyTorch image processor, cast to bfloat16 like the module.
    pixel_values = jax.random.uniform(
        jax.random.fold_in(root, 1), (4, 3, IMG_SIZE, IMG_SIZE), jnp.float32
    ).astype(jnp.bfloat16)

    # synthetic tokenized conversation: <bos> <img> <IMG_CONTEXT>*K </img> <latex> ...
    img_tokens_per_image = 2 * IMG_TOKENS_PER_TILE        # 2 tiles per image
    prompt = [BOS_ID, IMG_START_ID] + [IMG_CONTEXT_ID] * img_tokens_per_image \
             + [IMG_END_ID] + list(PROMPT_IDS)
    input_ids = jnp.array([prompt, prompt], dtype=jnp.int32)   # [B=2, S=13]

    out_ids = internvl_forward(params, pixel_values, input_ids)
    out_ids = jax.block_until_ready(out_ids)
    assert out_ids.shape == (2, input_ids.shape[1] + MAX_NEW_TOKENS)
    print("KERNEL_OK")
</pallas_src>

<mosaic_0001>
module attributes {stable_mosaic.version = 11 : i64} {
  func.func @_patch_embed_kernel(%arg0: i32, %arg1: memref<16x48xbf16, #tpu.memory_space<vmem>>, %arg2: memref<48x32xbf16, #tpu.memory_space<vmem>>, %arg3: memref<1x32xf32, #tpu.memory_space<vmem>>, %arg4: memref<16x32xbf16, #tpu.memory_space<vmem>>) attributes {dimension_semantics = [#tpu.dimension_semantics<parallel>], iteration_bounds = array<i64: 4>, scalar_prefetch = 0 : i64, scratch_operands = 0 : i64, tpu.core_type = #tpu.core_type<tc>, window_params = [{transform_indices = @transform_0, window_bounds = array<i64: 16, 48>}, {pipeline_mode = #tpu.pipeline_mode<synchronous>, transform_indices = @transform_1, window_bounds = array<i64: 48, 32>}, {pipeline_mode = #tpu.pipeline_mode<synchronous>, transform_indices = @transform_2, window_bounds = array<i64: 1, 32>}, {transform_indices = @transform_3, window_bounds = array<i64: 16, 32>}]} {
    %c0 = arith.constant 0 : index
    %c0_0 = arith.constant 0 : index
    %0 = vector.load %arg1[%c0, %c0_0] : memref<16x48xbf16, #tpu.memory_space<vmem>>, vector<16x48xbf16>
    %c0_1 = arith.constant 0 : index
    %c0_2 = arith.constant 0 : index
    %1 = vector.load %arg2[%c0_1, %c0_2] : memref<48x32xbf16, #tpu.memory_space<vmem>>, vector<48x32xbf16>
    %cst = arith.constant dense<0.000000e+00> : vector<16x32xf32>
    %2 = tpu.matmul %0, %1, %cst {dimension_numbers = #tpu.dot_dimension_numbers<[1], [0], [0], [1], [0, 0, 1, 1], [], []>} : vector<16x48xbf16>, vector<48x32xbf16>, vector<16x32xf32> -> vector<16x32xf32>
    %c0_3 = arith.constant 0 : index
    %c0_4 = arith.constant 0 : index
    %3 = vector.load %arg3[%c0_3, %c0_4] : memref<1x32xf32, #tpu.memory_space<vmem>>, vector<1x32xf32>
    %4 = vector.broadcast %3 : vector<1x32xf32> to vector<16x32xf32>
    %5 = arith.addf %2, %4 : vector<16x32xf32>
    %6 = arith.truncf %5 : vector<16x32xf32> to vector<16x32xbf16>
    %c0_5 = arith.constant 0 : index
    %c0_6 = arith.constant 0 : index
    %7 = vector.load %arg4[%c0_5, %c0_6] : memref<16x32xbf16, #tpu.memory_space<vmem>>, vector<16x32xbf16>
    tpu.vector_store %arg4[%c0_5, %c0_6], %6 {strides = array<i32>} : memref<16x32xbf16, #tpu.memory_space<vmem>>, vector<16x32xbf16>,
    return
  }
  func.func @transform_0(%arg0: i32) -> (i32, i32) {
    %c0_i32 = arith.constant 0 : i32
    %c0_i32_0 = arith.constant 0 : i32
    return %arg0, %c0_i32 : i32, i32
  }
  func.func @transform_1(%arg0: i32) -> (i32, i32) {
    %c0_i32 = arith.constant 0 : i32
    %c0_i32_0 = arith.constant 0 : i32
    %c0_i32_1 = arith.constant 0 : i32
    return %c0_i32, %c0_i32_0 : i32, i32
  }
  func.func @transform_2(%arg0: i32) -> (i32, i32) {
    %c0_i32 = arith.constant 0 : i32
    %c0_i32_0 = arith.constant 0 : i32
    %c0_i32_1 = arith.constant 0 : i32
    return %c0_i32, %c0_i32_0 : i32, i32
  }
  func.func @transform_3(%arg0: i32) -> (i32, i32) {
    %c0_i32 = arith.constant 0 : i32
    %c0_i32_0 = arith.constant 0 : i32
    return %arg0, %c0_i32 : i32, i32
  }
}

</mosaic_0001>

<llo_original>
// kernel: tpu_custom_call.1
$region0: #{tpu_custom_call.1}
  #allocation0 [shape = 'u32[]', space=smem, size = 0x4, offset = 0x4, fixed_abs, tag = 'smem constant byte address 0x4 - core index']
  #allocation1 [shape = 'u32[144,128]{1,0:T(1,128)}', space=vmem, size = 0x12000, scoped, tag = 'internal scratch']
  %s0 = inlined_call_operand.vmem [shape: bf16[64,48], index: 0, kind: input, shape index: {}]
  %s1 = inlined_call_operand.vmem [shape: bf16[48,32], index: 1, kind: input, shape index: {}]
  %s2 = inlined_call_operand.vmem [shape: f32[1,32], index: 2, kind: input, shape index: {}]
  %s3 = inlined_call_operand.vmem [shape: bf16[64,32], index: 3, kind: output, shape index: {}]
  %s4 = sld [smem:[#allocation0]]
  $region45: #{tpu_custom_call.1} parent=0
    _
  %s6 = ssub.s32 1, %s4
  %s7 = scalar_select 0, %s6, %s4
  loop: start=0, step=1, limit=6
  $region2: #{tpu_custom_call.1} parent=0 // loop_pre_header
    _
  $region3: #{tpu_custom_call.1} parent=0 // loop_header
    %s9 = sphi 0, %s13
    %p10 = scmp.ge.s32.totalorder %s9, 6
    %s19 = sphi 0, %s21
    %s22 = sphi 0, %s19
    %s23 = sphi 0, %s22
    %s39 = sphi 0, %s23
    %s43 = sphi 0, %s43
    %s45 = sphi 0, %s43
    %s46 = sphi 0, %s45
    %s60 = sphi 0, %s46
    %s64 = sphi 0, %s64
    %s66 = sphi 0, %s64
    %s67 = sphi 0, %s66
    %s81 = sphi 0, %s67
    %s87 = sphi 0, %s89
    %s90 = sphi 0, %s87
    %s91 = sphi 0, %s90
    %s107 = sphi 0, %s91
  $region4: #{tpu_custom_call.1} parent=0 // loop_header_branch
    %12 = sbr.rel (%p10) target = $region8
  $region5: #{tpu_custom_call.1} parent=0 // loop_body
    %s14 = ssub.s32 %s9, 1
    %s15 = ssub.s32 %s9, 2
    %s16 = sadd.s32 %s9, 1
    %s17 = ssub.s32 %s9, %s16
    %p18 = scmp.eq.s32.totalorder %s17, 0
    %s20 = sadd.s32 %s19, 1
    %s21 = scalar_select %p18, %s19, %s20
    %p24 = pneg %p18
    %p25 = scmp.eq.s32.totalorder %s9, 3
    %p26 = por %p24, %p25
    %p27 = scmp.ne.s32.totalorder %s19, %s22
    %p28 = scmp.eq.s32.totalorder %s9, 0
    %p29 = por %p27, %p28
    %p30 = scmp.ne.s32.totalorder %s19, %s22
    %p31 = scmp.eq.s32.totalorder %s14, 3
    %p32 = por %p30, %p31
    %p33 = scmp.ne.s32.totalorder %s22, %s23
    %p34 = scmp.eq.s32.totalorder %s14, 0
    %p35 = por %p33, %p34
    %p36 = scmp.ne.s32.totalorder %s22, %s23
    %p37 = scmp.eq.s32.totalorder %s15, 3
    %p38 = por %p36, %p37
    %p40 = scmp.ne.s32.totalorder %s23, %s39
    %p41 = scmp.eq.s32.totalorder %s15, 0
    %p42 = por %p40, %p41
    %s44 = sadd.s32 %s43, 1
    %p47 = scmp.eq.s32.totalorder %s9, 3
    %p48 = scmp.ne.s32.totalorder %s43, %s45
    %p49 = scmp.eq.s32.totalorder %s9, 0
    %p50 = por %p48, %p49
    %p51 = scmp.ne.s32.totalorder %s43, %s45
    %p52 = scmp.eq.s32.totalorder %s14, 3
    %p53 = por %p51, %p52
    %p54 = scmp.ne.s32.totalorder %s45, %s46
    %p55 = scmp.eq.s32.totalorder %s14, 0
    %p56 = por %p54, %p55
    %p57 = scmp.ne.s32.totalorder %s45, %s46
    %p58 = scmp.eq.s32.totalorder %s15, 3
    %p59 = por %p57, %p58
    %p61 = scmp.ne.s32.totalorder %s46, %s60
    %p62 = scmp.eq.s32.totalorder %s15, 0
    %p63 = por %p61, %p62
    %s65 = sadd.s32 %s64, 1
    %p68 = scmp.eq.s32.totalorder %s9, 3
    %p69 = scmp.ne.s32.totalorder %s64, %s66
    %p70 = scmp.eq.s32.totalorder %s9, 0
    %p71 = por %p69, %p70
    %p72 = scmp.ne.s32.totalorder %s64, %s66
    %p73 = scmp.eq.s32.totalorder %s14, 3
    %p74 = por %p72, %p73
    %p75 = scmp.ne.s32.totalorder %s66, %s67
    %p76 = scmp.eq.s32.totalorder %s14, 0
    %p77 = por %p75, %p76
    %p78 = scmp.ne.s32.totalorder %s66, %s67
    %p79 = scmp.eq.s32.totalorder %s15, 3
    %p80 = por %p78, %p79
    %p82 = scmp.ne.s32.totalorder %s67, %s81
    %p83 = scmp.eq.s32.totalorder %s15, 0
    %p84 = por %p82, %p83
    %s85 = ssub.s32 %s9, %s16
    %p86 = scmp.eq.s32.totalorder %s85, 0
    %s88 = sadd.s32 %s87, 1
    %s89 = scalar_select %p86, %s87, %s88
    %p92 = pneg %p86
    %p93 = scmp.eq.s32.totalorder %s9, 3
    %p94 = por %p92, %p93
    %p95 = scmp.ne.s32.totalorder %s87, %s90
    %p96 = scmp.eq.s32.totalorder %s9, 0
    %p97 = por %p95, %p96
    %p98 = scmp.ne.s32.totalorder %s87, %s90
    %p99 = scmp.eq.s32.totalorder %s14, 3
    %p100 = por %p98, %p99
    %p101 = scmp.ne.s32.totalorder %s90, %s91
    %p102 = scmp.eq.s32.totalorder %s14, 0
    %p103 = por %p101, %p102
    %p104 = scmp.ne.s32.totalorder %s90, %s91
    %p105 = scmp.eq.s32.totalorder %s15, 3
    %p106 = por %p104, %p105
    %p108 = scmp.ne.s32.totalorder %s91, %s107
    %p109 = scmp.eq.s32.totalorder %s15, 0
    %p110 = por %p108, %p109
    %p111 = scmp.le.s32.totalorder 1, %s9
    %p112 = scmp.lt.s32.totalorder %s9, 5
    %p113 = pnand %p111, %p112
    %p114 = pneg %p113
    // Predicated region
    $region9: #{tpu_custom_call.1} parent=5 // pred_check
      _
    $region10: #{tpu_custom_call.1} parent=5 // pred_check_branch
      %116 = sbr.rel (%p113) target = $region12
    $region11: #{tpu_custom_call.1} parent=5 // pred_region
      %s117 = ssub.s32 %s9, 1
      // Predicated region
      $region13: #{tpu_custom_call.1} parent=11 // pred_check
        %p118 = pneg %p56
      $region14: #{tpu_custom_call.1} parent=11 // pred_check_branch
        %120 = sbr.rel (%p118) target = $region16
      $region15: #{tpu_custom_call.1} parent=11 // pred_region
        _
      $region16: #{tpu_custom_call.1} parent=11 // pred_fallthru
        _
      // Predicated region
      $region17: #{tpu_custom_call.1} parent=11 // pred_check
        %p121 = pneg %p77
      $region18: #{tpu_custom_call.1} parent=11 // pred_check_branch
        %123 = sbr.rel (%p121) target = $region20
      $region19: #{tpu_custom_call.1} parent=11 // pred_region
        _
      $region20: #{tpu_custom_call.1} parent=11 // pred_fallthru
        _
    $region12: #{tpu_custom_call.1} parent=5 // pred_fallthru
      _
    %p124 = scmp.lt.s32.totalorder %s9, 4
    // Predicated region
    $region21: #{tpu_custom_call.1} parent=5 // pred_check
      %p125 = pneg %p124
    $region22: #{tpu_custom_call.1} parent=5 // pred_check_branch
      %127 = sbr.rel (%p125) target = $region24
    $region23: #{tpu_custom_call.1} parent=5 // pred_region
      // Predicated region
      $region25: #{tpu_custom_call.1} parent=23 // pred_check
        %p128 = pneg %p29
      $region26: #{tpu_custom_call.1} parent=23 // pred_check_branch
        %130 = sbr.rel (%p128) target = $region28
      $region27: #{tpu_custom_call.1} parent=23 // pred_region
        %s131 = smul.u32 2, %s9
        %p132 = scmp.lt.s32.totalorder %s131, 7
        %s133 = scalar_select %p132, %s131, 7
        %s134 = smul.addr %s133, 4
        %s135 = scalar_lea.vmem %s0, %s134
        %s136 = smul.u32 2, %s9
      $region28: #{tpu_custom_call.1} parent=23 // pred_fallthru
        _
    $region24: #{tpu_custom_call.1} parent=5 // pred_fallthru
      _
    %p137 = scmp.le.s32.totalorder 1, %s9
    %p138 = scmp.lt.s32.totalorder %s9, 5
    %p139 = pnand %p137, %p138
    %p140 = pneg %p139
    // Predicated region
    $region29: #{tpu_custom_call.1} parent=5 // pred_check
      _
    $region30: #{tpu_custom_call.1} parent=5 // pred_check_branch
      %142 = sbr.rel (%p139) target = $region32
    $region31: #{tpu_custom_call.1} parent=5 // pred_region
      %s143 = ssub.s32 %s9, 1
      %s144 = smul.u32 2, %s14
      %p145 = scmp.lt.s32.totalorder %s144, 7
      %s146 = scalar_select %p145, %s144, 7
      %s147 = smul.addr %s146, 4
      %s148 = scalar_lea.vmem %s0, %s147
      %p149 = pneg %p35
      %p150 = pneg %p32
      %p151 = pneg %p56
      %p152 = pneg %p53
      %p153 = pneg %p77
      %p154 = pneg %p74
      %p155 = pneg %p103
      %p156 = pneg %p100
      %s157 = smul.u32 2, %s14
      %p158 = scmp.lt.s32.totalorder %s157, 7
      %s159 = scalar_select %p158, %s157, 7
      %s160 = smul.addr %s159, 4
      %s161 = scalar_lea.vmem %s3, %s160
      %s162 = smul.u32 2, %s14
      %p163 = scmp.lt.s32.totalorder %s162, 7
      %s164 = scalar_select %p163, %s162, 7
      %s165 = smul.addr %s164, 4
      %s166 = scalar_lea.vmem %s0, %s165
      %s167 = smul.u32 2, %s14
      %s168 = smul.u32 2, %s14
      %p169 = scmp.lt.s32.totalorder %s168, 7
      %s170 = scalar_select %p169, %s168, 7
      %s171 = smul.addr %s170, 4
      %s172 = scalar_lea.vmem %s3, %s171
      %s173 = smul.u32 2, %s14
      %v175 = vld [vmem:[%s166] sm:$0xf]
      %v176 = vld [vmem:[%s166 + $0x4] sm:$0xf]
      %v177 = vld [vmem:[%s1] sm:$0xf]
      %v178 = vld [vmem:[%s1 + $0x4] sm:$0xf]
      %v179 = vld [vmem:[%s1 + $0x8] sm:$0xf]
      %v180 = vld [vmem:[%s1 + $0xc] sm:$0xf]
      %v181 = vld [vmem:[%s1 + $0x10] sm:$0xf]
      %v182 = vld [vmem:[%s1 + $0x14] sm:$0xf]
      %v183 = vld [vmem:[%s2] sm:$0x1]
      %v185 = vlaneseq
      %v186 = vshrl.u32 %v185, 7
      %v187 = vsub.s32 0, %v186
      %v188 = vrot.slane %v183, %v187
      %v192 = vunpack.c.l.b16 %v175
      %v193 = vunpack.c.l.b16 %v176
      %v194 = vpack.c.b16 %v193, %v192
      %v201 = vunpack.c.l.b16 %v177
      %v202 = vunpack.c.l.b16 %v178
      %v203 = vunpack.c.l.b16 %v179
      %v204 = vunpack.c.l.b16 %v180
      %v205 = vunpack.c.l.b16 %v181
      %v206 = vunpack.c.l.b16 %v182
      %v207 = vpack.c.b16 %v202, %v201
      %v208 = vpack.c.b16 %v204, %v203
      %v209 = vpack.c.b16 %v206, %v205
      %vm213 = vcmask 392192
      %v215 = vsel %vm213, %v194, 0
      %217 = vmatprep.subr.bf16.mxu0 0
      %218 = vmatpush1.bf16.msra.mxu0 %v207
      %219 = vmatprep.subr.bf16.mxu0 0
      %220 = vmatpush1.bf16.msra.mxu0 %v208
      %221 = vmatprep.subr.bf16.mxu0 0
      %222 = vmatpush1.bf16.msra.mxu0 %v209
      %223 = vmatprep.subr.bf16.mxu0 0
      %224 = vmatpush1.bf16.msra.mxu0 0
      %225 = vmatprep.subr.bf16.mxu0 0
      %226 = vmatpush1.bf16.msra.mxu0 0
      %227 = vmatprep.subr.bf16.mxu0 0
      %228 = vmatpush1.bf16.msra.mxu0 0
      %229 = vmatprep.subr.bf16.mxu0 0
      %230 = vmatpush1.bf16.msra.mxu0 0
      %231 = vmatprep.subr.bf16.mxu0 0
      %232 = vmatpush1.bf16.msra.mxu0 0
      %233 = vmatprep.subr.bf16.mxu0 0
      %234 = vmatpush1.bf16.msra.mxu0 0
      %235 = vmatprep.subr.bf16.mxu0 0
      %236 = vmatpush1.bf16.msra.mxu0 0
      %237 = vmatprep.subr.bf16.mxu0 0
      %238 = vmatpush1.bf16.msra.mxu0 0
      %239 = vmatprep.subr.bf16.mxu0 0
      %240 = vmatpush1.bf16.msra.mxu0 0
      %241 = vmatprep.subr.bf16.mxu0 0
      %242 = vmatpush1.bf16.msra.mxu0 0
      %243 = vmatprep.subr.bf16.mxu0 0
      %244 = vmatpush1.bf16.msra.mxu0 0
      %245 = vmatprep.subr.bf16.mxu0 0
      %246 = vmatpush1.bf16.msra.mxu0 0
      %247 = vmatprep.subr.bf16.mxu0 0
      %248 = vmatpush1.bf16.msra.mxu0 0
      %249 = vmatprep.mubr.bf16.mxu0 0
      %250 = vmatmul.mubr.bf16.gmra.mrb[0].mxu0 %v215
      %v251 = vpop.f32.mrb[0].mxu0
      %v252 = vadd.f32 %v188, %v251
      %v253 = vpop.f32.mrb[0].mxu0
      %v254 = vpop.f32.mrb[0].mxu0
      %v255 = vadd.f32 %v188, %v254
      %v256 = vpop.f32.mrb[0].mxu0
      %257 = vdwg.mxu0
      %v258 = vpack.c.bf16 %v255, %v252
      %v260 = vunpack.c.l.b16 %v258
      %v261 = vunpack.c.h.b16 %v258
      %v262 = vpack.c.b16 %v260, %v260
      %v263 = vpack.c.b16 %v261, %v261
      %vm266 = vcmask 257024
      %267 = vst.msk [vmem:[%s172] sm:$0xf] %vm266, %v262
      %268 = vst.msk [vmem:[%s172 + $0x4] sm:$0xf] %vm266, %v263
      %s269 = smul.u32 2, %s14
      %p270 = scmp.lt.s32.totalorder %s269, 7
      %s271 = scalar_select %p270, %s269, 7
      %s272 = smul.addr %s271, 4
      %s273 = scalar_lea.vmem %s3, %s272
      // Predicated region
      $region33: #{tpu_custom_call.1} parent=31 // pred_check
        %p274 = pneg %p100
      $region34: #{tpu_custom_call.1} parent=31 // pred_check_branch
        %276 = sbr.rel (%p274) target = $region36
      $region35: #{tpu_custom_call.1} parent=31 // pred_region
        %s277 = smul.u32 2, %s14
      $region36: #{tpu_custom_call.1} parent=31 // pred_fallthru
        _
    $region32: #{tpu_custom_call.1} parent=5 // pred_fallthru
      _
    %p278 = scmp.le.s32.totalorder 2, %s9
    // Predicated region
    $region37: #{tpu_custom_call.1} parent=5 // pred_check
      %p279 = pneg %p278
    $region38: #{tpu_custom_call.1} parent=5 // pred_check_branch
      %281 = sbr.rel (%p279) target = $region40
    $region39: #{tpu_custom_call.1} parent=5 // pred_region
      %s282 = ssub.s32 %s9, 2
      // Predicated region
      $region41: #{tpu_custom_call.1} parent=39 // pred_check
        %p283 = pneg %p106
      $region42: #{tpu_custom_call.1} parent=39 // pred_check_branch
        %285 = sbr.rel (%p283) target = $region44
      $region43: #{tpu_custom_call.1} parent=39 // pred_region
        %s286 = smul.u32 2, %s15
        %p287 = scmp.lt.s32.totalorder %s286, 7
        %s288 = scalar_select %p287, %s286, 7
        %s289 = smul.addr %s288, 4
        %s290 = scalar_lea.vmem %s3, %s289
      $region44: #{tpu_custom_call.1} parent=39 // pred_fallthru
        _
    $region40: #{tpu_custom_call.1} parent=5 // pred_fallthru
      _
  $region6: #{tpu_custom_call.1} parent=0 // loop_footer
    %s13 = sadd.s32 1, %s9
  $region7: #{tpu_custom_call.1} parent=0 // loop_footer_branch
    %8 = sbr.rel target = $region3
  $region8: #{tpu_custom_call.1} parent=0 // loop_exit
    _

</llo_original>
